<compile_context>
chip_gen: v7x
topology: tpu7x:2x2x1
jax: 0.10.0
libtpu: 0.0.40
codegen_flags: <defaults>
</compile_context>

<pallas_src>
import functools

import jax
import jax.numpy as jnp
from jax.experimental import pallas as pl
from jax.experimental.pallas import tpu as pltpu

EMBED_DIM = 4       # simple_lift pairwise embedding: [dx, dy, dz, |d|]
KW_HIDDEN = 32      # weight-net hidden width
KD = 16             # PointConv-trick penultimate kernel width (cmco_ci in LieConv)
_MXU_DTYPE = jnp.bfloat16   # MXU-native operand dtype on v5e/v6e/v7x (f32 accumulation)

_VMEM_LIMIT_CACHE = None


def _vmem_limit():
    """Generation-aware scoped-VMEM limit (~3/4 of per-core VMEM, capped)."""
    global _VMEM_LIMIT_CACHE
    if _VMEM_LIMIT_CACHE is None:
        try:
            cap = pltpu.get_tpu_info().vmem_capacity_bytes
            _VMEM_LIMIT_CACHE = int(min(cap * 3 // 4, 100 * 1024 * 1024))
        except Exception:
            _VMEM_LIMIT_CACHE = 48 * 1024 * 1024
    return _VMEM_LIMIT_CACHE


def _cparams(dims):
    return pltpu.CompilerParams(dimension_semantics=dims,
                                vmem_limit_bytes=_vmem_limit())


def _swish(x):
    return x * (1.0 / (1.0 + jnp.exp(-x)))


def _row_tile(m, bytes_per_row, budget=6 * 1024 * 1024):
    """Largest row tile dividing m that is a multiple of 8 and fits the VMEM budget."""
    cap = min(4096, max(8, budget // max(int(bytes_per_row), 1)))
    cap -= cap % 8
    t = max(cap, 8)
    while t >= 8:
        if m % t == 0:
            return t
        t -= 8
    return m


def _pair_tile(n, cands):
    for t in cands:
        if n % t == 0:
            return t
    return n


# ----------------------------------------------------------------------------
# Input linear:  y = x @ W + b, with fused masked BN statistics of the output
# ----------------------------------------------------------------------------
def _linear_stats_kernel(x_ref, m_ref, w_ref, b_ref, o_ref, ssum_ref, ssq_ref):
    step = pl.program_id(0)
    y = jnp.dot(x_ref[...].astype(_MXU_DTYPE), w_ref[...].astype(_MXU_DTYPE),
                preferred_element_type=jnp.float32) + b_ref[...]
    o_ref[...] = y

    @pl.when(step == 0)
    def _():
        ssum_ref[...] = jnp.zeros_like(ssum_ref)
        ssq_ref[...] = jnp.zeros_like(ssq_ref)

    ym = y * m_ref[...]
    ssum_ref[...] += jnp.sum(ym, axis=0, keepdims=True)
    ssq_ref[...] += jnp.sum(ym * ym, axis=0, keepdims=True)


def pallas_linear_stats(x2d, mask2d, w, b):
    m, cin = x2d.shape
    cout = w.shape[1]
    tm = _row_tile(m, 4 * (cin + cout))
    return pl.pallas_call(
        _linear_stats_kernel,
        out_shape=(jax.ShapeDtypeStruct((m, cout), jnp.float32),
                   jax.ShapeDtypeStruct((1, cout), jnp.float32),
                   jax.ShapeDtypeStruct((1, cout), jnp.float32)),
        grid=(m // tm,),
        in_specs=[pl.BlockSpec((tm, cin), lambda i: (i, 0)),
                  pl.BlockSpec((tm, 1), lambda i: (i, 0)),
                  pl.BlockSpec((cin, cout), lambda i: (0, 0)),
                  pl.BlockSpec((1, cout), lambda i: (0, 0))],
        out_specs=(pl.BlockSpec((tm, cout), lambda i: (i, 0)),
                   pl.BlockSpec((1, cout), lambda i: (0, 0)),
                   pl.BlockSpec((1, cout), lambda i: (0, 0))),
        compiler_params=_cparams(("arbitrary",)),
    )(x2d, mask2d, w, b.reshape(1, cout))


# ----------------------------------------------------------------------------
# Fused  BN-apply -> Swish -> Linear (-> + residual), with fused output statistics
# ----------------------------------------------------------------------------
def _bn_swish_linear_kernel(x_ref, m_ref, sc_ref, sh_ref, w_ref, b_ref, *rest,
                            has_res):
    if has_res:
        r_ref, o_ref, ssum_ref, ssq_ref = rest
    else:
        o_ref, ssum_ref, ssq_ref = rest
    step = pl.program_id(0)

    a = _swish(x_ref[...] * sc_ref[...] + sh_ref[...])
    y = jnp.dot(a.astype(_MXU_DTYPE), w_ref[...].astype(_MXU_DTYPE),
                preferred_element_type=jnp.float32) + b_ref[...]
    if has_res:
        y = y + r_ref[...]
    o_ref[...] = y

    @pl.when(step == 0)
    def _():
        ssum_ref[...] = jnp.zeros_like(ssum_ref)
        ssq_ref[...] = jnp.zeros_like(ssq_ref)

    ym = y * m_ref[...]
    ssum_ref[...] += jnp.sum(ym, axis=0, keepdims=True)
    ssq_ref[...] += jnp.sum(ym * ym, axis=0, keepdims=True)


def pallas_bn_swish_linear(x2d, mask2d, scale, shift, w, b, residual=None):
    m, cin = x2d.shape
    cout = w.shape[1]
    has_res = residual is not None
    tm = _row_tile(m, 4 * (cin + (2 if has_res else 1) * cout))
    in_specs = [pl.BlockSpec((tm, cin), lambda i: (i, 0)),
                pl.BlockSpec((tm, 1), lambda i: (i, 0)),
                pl.BlockSpec((1, cin), lambda i: (0, 0)),
                pl.BlockSpec((1, cin), lambda i: (0, 0)),
                pl.BlockSpec((cin, cout), lambda i: (0, 0)),
                pl.BlockSpec((1, cout), lambda i: (0, 0))]
    args = [x2d, mask2d, scale, shift, w, b.reshape(1, cout)]
    if has_res:
        in_specs.append(pl.BlockSpec((tm, cout), lambda i: (i, 0)))
        args.append(residual)
    return pl.pallas_call(
        functools.partial(_bn_swish_linear_kernel, has_res=has_res),
        out_shape=(jax.ShapeDtypeStruct((m, cout), jnp.float32),
                   jax.ShapeDtypeStruct((1, cout), jnp.float32),
                   jax.ShapeDtypeStruct((1, cout), jnp.float32)),
        grid=(m // tm,),
        in_specs=in_specs,
        out_specs=(pl.BlockSpec((tm, cout), lambda i: (i, 0)),
                   pl.BlockSpec((1, cout), lambda i: (0, 0)),
                   pl.BlockSpec((1, cout), lambda i: (0, 0))),
        compiler_params=_cparams(("arbitrary",)),
    )(*args)


# ----------------------------------------------------------------------------
# Standalone masked statistics (only used for the post-conv BN, narrowest tensor)
# ----------------------------------------------------------------------------
def _stats_kernel(x_ref, m_ref, ssum_ref, ssq_ref):
    step = pl.program_id(0)

    @pl.when(step == 0)
    def _():
        ssum_ref[...] = jnp.zeros_like(ssum_ref)
        ssq_ref[...] = jnp.zeros_like(ssq_ref)

    xm = x_ref[...] * m_ref[...]
    ssum_ref[...] += jnp.sum(xm, axis=0, keepdims=True)
    ssq_ref[...] += jnp.sum(xm * xm, axis=0, keepdims=True)


def pallas_stats(x2d, mask2d):
    m, c = x2d.shape
    tm = _row_tile(m, 4 * c)
    return pl.pallas_call(
        _stats_kernel,
        out_shape=(jax.ShapeDtypeStruct((1, c), jnp.float32),
                   jax.ShapeDtypeStruct((1, c), jnp.float32)),
        grid=(m // tm,),
        in_specs=[pl.BlockSpec((tm, c), lambda i: (i, 0)),
                  pl.BlockSpec((tm, 1), lambda i: (i, 0))],
        out_specs=(pl.BlockSpec((1, c), lambda i: (0, 0)),
                   pl.BlockSpec((1, c), lambda i: (0, 0))),
        compiler_params=_cparams(("arbitrary",)),
    )(x2d, mask2d)


def _bn_scale_shift(ssum, ssq, nvalid, gamma, beta, eps=1e-5):
    # Tiny [1, C] epilogue (well below kernel-launch granularity) -> plain XLA.
    # TODO(synk): running-stats (inference-mode) tracking of nn.BatchNorm1d is not
    # reproduced; forward uses masked training-mode batch statistics like the reference.
    mean = ssum / nvalid
    var = jnp.maximum(ssq / nvalid - mean * mean, 0.0)
    ratio = gamma.reshape(1, -1) / jnp.sqrt(var + eps)
    return ratio, beta.reshape(1, -1) - mean * ratio


# ----------------------------------------------------------------------------
# Neighbor feature producer for LieConvSimple (hoisted out of the O(N^2) pair loop):
#   v'[j,:] = swish(BN2(x2[j,:])) * mask_j
#   G[j, h*Co+o]      = (1/z_b) * v'[j,:] @ Wfold[:, h*Co+o]        h < KW_HIDDEN
#   G[j, KW*Co+o]     = (1/z_b) * ( v'[j,:] @ Wb[:, o] + mask_j*(1/z_b)*bias[o] )
# where Wfold folds the weight-net output layer w2 into the PointConv linear, Wb folds
# its bias b2, and the last ("constant") slab carries the conv bias / z_b term.
# ----------------------------------------------------------------------------
def _gprod_kernel(x_ref, m_ref, iz_ref, sc_ref, sh_ref, w_ref, bf_ref, o_ref):
    v = _swish(x_ref[...] * sc_ref[...] + sh_ref[...]) * m_ref[...]
    g = jnp.dot(v.astype(_MXU_DTYPE), w_ref[...].astype(_MXU_DTYPE),
                preferred_element_type=jnp.float32)
    iz = iz_ref[...]
    o_ref[...] = (g + (m_ref[...] * iz) * bf_ref[...]) * iz


def pallas_gprod(x2d, mask2d, invz2d, scale, shift, wfold_full, bias_full):
    m, cin = x2d.shape
    cols = wfold_full.shape[1]
    tm = _row_tile(m, 4 * (cin + cols))
    return pl.pallas_call(
        _gprod_kernel,
        out_shape=jax.ShapeDtypeStruct((m, cols), jnp.float32),
        grid=(m // tm,),
        in_specs=[pl.BlockSpec((tm, cin), lambda i: (i, 0)),
                  pl.BlockSpec((tm, 1), lambda i: (i, 0)),
                  pl.BlockSpec((tm, 1), lambda i: (i, 0)),
                  pl.BlockSpec((1, cin), lambda i: (0, 0)),
                  pl.BlockSpec((1, cin), lambda i: (0, 0)),
                  pl.BlockSpec((cin, cols), lambda i: (0, 0)),
                  pl.BlockSpec((1, cols), lambda i: (0, 0))],
        out_specs=pl.BlockSpec((tm, cols), lambda i: (i, 0)),
        compiler_params=_cparams(("parallel",)),
    )(x2d, mask2d, invz2d, scale, shift, wfold_full, bias_full)


# ----------------------------------------------------------------------------
# LieConvSimple pair kernel (full neighborhood, nbhd = inf, PointConv trick):
#   per (Ni, Nj) tile:   e = [dx, dy, dz, |d|]  (recomputed from coords, never hits HBM)
#   s_h = swish(e . w1[:,h] + b1[h])             -- cheap VALU, 4 scalar FMAs per hidden
#   out[i,o] += sum_h  s_h[i,:] @ G[b, h, :, o]  -- KW accumulated MXU matmuls (bf16)
#             + column-sum of the constant slab G[b, KW, :, o]
# Mask, 1/|nbhd|, weight-net output layer and conv bias are already folded into G.
# ----------------------------------------------------------------------------
def _lieconv_kernel(ci_ref, cjT_ref, g_ref, w1_ref, b1_ref, o_ref, *, kw_hidden):
    j = pl.program_id(2)
    nj = pl.num_programs(2)

    @pl.when(j == 0)
    def _():
        o_ref[...] = jnp.zeros_like(o_ref)

    # pairwise simple_lift embedding for this (Ni, Nj) tile
    # TODO(synk): exact SE3 log-map lift with stabilizer sampling (liftsamples > 1) has no
    # clean closed form here; approximated by the T(3)/'simple' lift [x_i - x_j, |x_i - x_j|].
    ci = ci_ref[...]                                                 # [TI, 3]
    cjT = cjT_ref[...]                                               # [3, TJ]
    dx = ci[:, 0:1] - cjT[0:1, :]
    dy = ci[:, 1:2] - cjT[1:2, :]
    dz = ci[:, 2:3] - cjT[2:3, :]
    rr = jnp.sqrt(dx * dx + dy * dy + dz * dz + 1e-12)               # [TI, TJ]

    # constant slab (folded weight-net bias b2, conv bias and 1/z): ones @ G[KW] == column sum
    part = jnp.broadcast_to(jnp.sum(g_ref[kw_hidden], axis=0, keepdims=True),
                            o_ref.shape)

    # TODO(synk): the weight-net's internal BatchNorm and output activation are omitted
    # (Linear -> Swish -> Linear form); w1/b1 scalars come from SMEM, one live accumulator.
    for h in range(kw_hidden):
        pre = (dx * w1_ref[0, h] + dy * w1_ref[1, h] + dz * w1_ref[2, h]
               + rr * w1_ref[3, h] + b1_ref[0, h])
        s = _swish(pre)
        part = part + jnp.dot(s.astype(_MXU_DTYPE), g_ref[h].astype(_MXU_DTYPE),
                              preferred_element_type=jnp.float32)

    o_ref[...] += part


def pallas_lieconv(coords, coords_t, g4, wn1_w, wn1_b):
    # coords [B,N,3], coords_t [B,3,N], g4 [B, KW+1, N, Co], wn1_w [4,KW], wn1_b [KW]
    B, N, _ = coords.shape
    nslab = g4.shape[1]
    co = g4.shape[-1]
    kw_hidden = nslab - 1
    ti = _pair_tile(N, (512, 256, 128))
    tj = _pair_tile(N, (128,))
    smem = pl.BlockSpec(memory_space=pltpu.MemorySpace.SMEM)
    return pl.pallas_call(
        functools.partial(_lieconv_kernel, kw_hidden=kw_hidden),
        out_shape=jax.ShapeDtypeStruct((B, N, co), jnp.float32),
        grid=(B, N // ti, N // tj),
        in_specs=[
            pl.BlockSpec((None, ti, 3), lambda b, i, j: (b, i, 0)),       # query coords
            pl.BlockSpec((None, 3, tj), lambda b, i, j: (b, 0, j)),       # neighbor coords^T
            pl.BlockSpec((None, nslab, tj, co), lambda b, i, j: (b, 0, j, 0)),  # folded G
            smem, smem,                                                   # weight-net layer 1
        ],
        out_specs=pl.BlockSpec((None, ti, co), lambda b, i, j: (b, i, 0)),
        compiler_params=_cparams(("parallel", "parallel", "arbitrary")),
    )(coords, coords_t, g4, wn1_w, wn1_b.reshape(1, -1))


# ----------------------------------------------------------------------------
# Fused head: MaskBatchNormNd -> Swish -> Linear(k, num_outputs) -> GlobalPool(mean)
# mw = mask/z_b folds the masked mean into a per-row weight; the Linear bias enters once.
# ----------------------------------------------------------------------------
def _head_pool_kernel(x_ref, mw_ref, sc_ref, sh_ref, w_ref, b_ref, o_ref):
    n = pl.program_id(1)

    @pl.when(n == 0)
    def _():
        o_ref[...] = b_ref[...]

    a = _swish(x_ref[...] * sc_ref[...] + sh_ref[...])
    y = jnp.dot(a.astype(_MXU_DTYPE), w_ref[...].astype(_MXU_DTYPE),
                preferred_element_type=jnp.float32)
    o_ref[...] += jnp.sum(y * mw_ref[...], axis=0, keepdims=True)


def pallas_head_pool(x2d, mw2d, scale, shift, w, b, B, N):
    _, k = x2d.shape
    no = w.shape[1]
    tn = _row_tile(N, 4 * (k + no))
    NN = N // tn
    out = pl.pallas_call(
        _head_pool_kernel,
        out_shape=jax.ShapeDtypeStruct((B, 1, no), jnp.float32),
        grid=(B, NN),
        in_specs=[pl.BlockSpec((tn, k), lambda b, n: (b * NN + n, 0)),
                  pl.BlockSpec((tn, 1), lambda b, n: (b * NN + n, 0)),
                  pl.BlockSpec((1, k), lambda b, n: (0, 0)),
                  pl.BlockSpec((1, k), lambda b, n: (0, 0)),
                  pl.BlockSpec((k, no), lambda b, n: (0, 0)),
                  pl.BlockSpec((1, no), lambda b, n: (0, 0))],
        out_specs=pl.BlockSpec((None, 1, no), lambda b, n: (b, 0, 0)),
        compiler_params=_cparams(("parallel", "arbitrary")),
    )(x2d, mw2d, scale, shift, w, b.reshape(1, no))
    return out.reshape(B, no)


# ----------------------------------------------------------------------------
# Parameters (deterministic synthetic init; shapes follow the module __init__)
# ----------------------------------------------------------------------------
def _dense(key, cin, cout):
    wk, bk = jax.random.split(key)
    w = jax.random.normal(wk, (cin, cout), jnp.float32) * (1.0 / jnp.sqrt(cin))
    b = 0.1 * jax.random.normal(bk, (cout,), jnp.float32)
    return w, b


def _bn(c):
    return jnp.ones((c,), jnp.float32), jnp.zeros((c,), jnp.float32)


def init_params(key, chin, k, num_layers, num_outputs):
    keys = iter(jax.random.split(key, 2 + 5 * num_layers))
    params = {"lin_in": _dense(next(keys), chin, k), "blocks": []}
    for _ in range(num_layers):
        ci, co = k // 4, k // 4
        wlin, blin = _dense(next(keys), ci * KD, co)        # PointConv linear (Ci*KD -> Co)
        wflat = wlin.reshape(ci, KD * co)                   # Wflat[c, kd*Co+o] == wlin[c*KD+kd, o]
        params["blocks"].append({
            "bn1": _bn(k),
            "lin1": _dense(next(keys), k, k // 4),
            "bn2": _bn(k // 4),
            "wn1": _dense(next(keys), EMBED_DIM, KW_HIDDEN),
            "wn2": _dense(next(keys), KW_HIDDEN, KD),
            "conv_wflat": wflat,
            "conv_b": blin,
            "bn3": _bn(k // 4),
            "lin2": _dense(next(keys), k // 4, k),
        })
    params["bn_out"] = _bn(k)
    params["lin_out"] = _dense(next(keys), k, num_outputs)
    return params


# ----------------------------------------------------------------------------
# Forward pass
# ----------------------------------------------------------------------------
def lie_resnet_forward(params, coords, values, mask):
    B, N, _ = coords.shape
    mask_f = mask.astype(jnp.float32)
    mask2d = mask_f.reshape(B * N, 1)
    z = jnp.maximum(jnp.sum(mask_f, axis=1, keepdims=True), 1.0)          # [B,1] nbhd size
    invz2d = jnp.broadcast_to(1.0 / z, (B, N)).reshape(B * N, 1)
    nvalid = jnp.maximum(jnp.sum(mask_f), 1.0)                             # BN stats count
    coords_t = jnp.transpose(coords, (0, 2, 1))                            # [B,3,N] (tiny)

    # Pass(Linear(chin, k), dim=1), fused masked stats of the output for BN1
    vals, ssum, ssq = pallas_linear_stats(values.reshape(B * N, -1), mask2d,
                                          *params["lin_in"])

    for blk in params["blocks"]:
        # BN1 -> Swish -> Linear(k, k/4)            (fused; emits stats for BN2)
        sc1, sh1 = _bn_scale_shift(ssum, ssq, nvalid, *blk["bn1"])
        x2, s2, q2 = pallas_bn_swish_linear(vals, mask2d, sc1, sh1, *blk["lin1"])
        sc2, sh2 = _bn_scale_shift(s2, q2, nvalid, *blk["bn2"])

        # Fold weight-net layer 2 (w2,b2), PointConv linear + bias and 1/z into G (param-only)
        w2, b2 = blk["wn2"]
        ci_dim = blk["conv_wflat"].shape[0]
        co = blk["conv_b"].shape[0]
        wflat3 = blk["conv_wflat"].reshape(ci_dim, KD, co)
        wfold = jnp.einsum("cko,hk->cho", wflat3, w2).reshape(ci_dim, KW_HIDDEN * co)
        wb = jnp.einsum("cko,k->co", wflat3, b2)
        wfold_full = jnp.concatenate([wfold, wb], axis=1)                  # [Ci,(KW+1)*Co]
        bias_full = jnp.concatenate(
            [jnp.zeros((KW_HIDDEN * co,), jnp.float32), blk["conv_b"]]).reshape(1, -1)

        # BN2 -> Swish -> mask -> neighbor feature tensor G (hoisted out of the pair loop)
        # TODO(synk): nbhd/fill Monte-Carlo neighborhood subsampling is skipped
        # (nbhd=inf default => full neighborhood).
        g2d = pallas_gprod(x2, mask2d, invz2d, sc2, sh2, wfold_full, bias_full)
        g4 = jnp.transpose(g2d.reshape(B, N, KW_HIDDEN + 1, co), (0, 2, 1, 3))

        # LieConvSimple pair kernel (no O(N^2) tensor touches HBM)
        x4 = pallas_lieconv(coords, coords_t, g4, *blk["wn1"])
        x4_2d = x4.reshape(B * N, co)

        # BN3 stats (standalone pass on the narrowest tensor), then
        # BN3 -> Swish -> Linear(k/4, k) + residual (fused; emits stats for next BN1 / BN_out)
        s3, q3 = pallas_stats(x4_2d, mask2d)
        sc3, sh3 = _bn_scale_shift(s3, q3, nvalid, *blk["bn3"])
        vals, ssum, ssq = pallas_bn_swish_linear(x4_2d, mask2d, sc3, sh3,
                                                 *blk["lin2"], residual=vals)

    # MaskBatchNormNd -> Pass(Swish) -> Pass(Linear(k, num_outputs)) -> GlobalPool(mean)
    sc, sh = _bn_scale_shift(ssum, ssq, nvalid, *params["bn_out"])
    return pallas_head_pool(vals, mask2d * invz2d, sc, sh, *params["lin_out"], B=B, N=N)


if __name__ == "__main__":
    B, N, CHIN = 2, 8, 4                      # batch, points, input channels
    K, NUM_LAYERS, NUM_OUTPUTS = 32, 2, 1     # small widths for the example

    key = jax.random.PRNGKey(0)
    kc, kv, kp = jax.random.split(key, 3)
    coords = jax.random.normal(kc, (B, N, 3), jnp.float32)
    values = jax.random.normal(kv, (B, N, CHIN), jnp.float32)
    mask = jnp.ones((B, N), dtype=bool).at[:, -1].set(False)   # last point padded

    params = init_params(kp, CHIN, K, NUM_LAYERS, NUM_OUTPUTS)
    out = lie_resnet_forward(params, coords, values, mask)
    out = jax.block_until_ready(out)
    assert out.shape == (B, NUM_OUTPUTS) and bool(jnp.all(jnp.isfinite(out)))
    print("KERNEL_OK")
</pallas_src>

<mosaic_0001>
module attributes {stable_mosaic.version = 11 : i64} {
  func.func @_linear_stats_kernel(%arg0: i32, %arg1: memref<16x4xf32, #tpu.memory_space<vmem>>, %arg2: memref<16x1xf32, #tpu.memory_space<vmem>>, %arg3: memref<4x32xf32, #tpu.memory_space<vmem>>, %arg4: memref<1x32xf32, #tpu.memory_space<vmem>>, %arg5: memref<16x32xf32, #tpu.memory_space<vmem>>, %arg6: memref<1x32xf32, #tpu.memory_space<vmem>>, %arg7: memref<1x32xf32, #tpu.memory_space<vmem>>) attributes {dimension_semantics = [#tpu.dimension_semantics<arbitrary>], iteration_bounds = array<i64: 1>, scalar_prefetch = 0 : i64, scratch_operands = 0 : i64, tpu.core_type = #tpu.core_type<tc>, window_params = [{transform_indices = @transform_0, window_bounds = array<i64: 16, 4>}, {transform_indices = @transform_1, window_bounds = array<i64: 16, 1>}, {pipeline_mode = #tpu.pipeline_mode<synchronous>, transform_indices = @transform_2, window_bounds = array<i64: 4, 32>}, {pipeline_mode = #tpu.pipeline_mode<synchronous>, transform_indices = @transform_3, window_bounds = array<i64: 1, 32>}, {transform_indices = @transform_4, window_bounds = array<i64: 16, 32>}, {pipeline_mode = #tpu.pipeline_mode<synchronous>, transform_indices = @transform_5, window_bounds = array<i64: 1, 32>}, {pipeline_mode = #tpu.pipeline_mode<synchronous>, transform_indices = @transform_6, window_bounds = array<i64: 1, 32>}]} {
    %c0 = arith.constant 0 : index
    %c0_0 = arith.constant 0 : index
    %0 = vector.load %arg1[%c0, %c0_0] : memref<16x4xf32, #tpu.memory_space<vmem>>, vector<16x4xf32>
    %1 = arith.truncf %0 : vector<16x4xf32> to vector<16x4xbf16>
    %c0_1 = arith.constant 0 : index
    %c0_2 = arith.constant 0 : index
    %2 = vector.load %arg3[%c0_1, %c0_2] : memref<4x32xf32, #tpu.memory_space<vmem>>, vector<4x32xf32>
    %3 = arith.truncf %2 : vector<4x32xf32> to vector<4x32xbf16>
    %cst = arith.constant dense<0.000000e+00> : vector<16x32xf32>
    %4 = tpu.matmul %1, %3, %cst {dimension_numbers = #tpu.dot_dimension_numbers<[1], [0], [0], [1], [0, 0, 1, 1], [], []>} : vector<16x4xbf16>, vector<4x32xbf16>, vector<16x32xf32> -> vector<16x32xf32>
    %c0_3 = arith.constant 0 : index
    %c0_4 = arith.constant 0 : index
    %5 = vector.load %arg4[%c0_3, %c0_4] : memref<1x32xf32, #tpu.memory_space<vmem>>, vector<1x32xf32>
    %6 = vector.broadcast %5 : vector<1x32xf32> to vector<16x32xf32>
    %7 = arith.addf %4, %6 : vector<16x32xf32>
    %c0_5 = arith.constant 0 : index
    %c0_6 = arith.constant 0 : index
    %8 = vector.load %arg5[%c0_5, %c0_6] : memref<16x32xf32, #tpu.memory_space<vmem>>, vector<16x32xf32>
    tpu.vector_store %arg5[%c0_5, %c0_6], %7 {strides = array<i32>} : memref<16x32xf32, #tpu.memory_space<vmem>>, vector<16x32xf32>,
    %c0_i32 = arith.constant 0 : i32
    %9 = arith.cmpi eq, %arg0, %c0_i32 : i32
    %10 = arith.extui %9 : i1 to i32
    %c0_i32_7 = arith.constant 0 : i32
    %11 = arith.cmpi ne, %10, %c0_i32_7 : i32
    scf.if %11 {
      %cst_20 = arith.constant 0.000000e+00 : f32
      %26 = vector.broadcast %cst_20 : f32 to vector<1x32xf32>
      %c0_21 = arith.constant 0 : index
      %c0_22 = arith.constant 0 : index
      %27 = vector.load %arg6[%c0_21, %c0_22] : memref<1x32xf32, #tpu.memory_space<vmem>>, vector<1x32xf32>
      tpu.vector_store %arg6[%c0_21, %c0_22], %26 {strides = array<i32>} : memref<1x32xf32, #tpu.memory_space<vmem>>, vector<1x32xf32>,
      %cst_23 = arith.constant 0.000000e+00 : f32
      %28 = vector.broadcast %cst_23 : f32 to vector<1x32xf32>
      %c0_24 = arith.constant 0 : index
      %c0_25 = arith.constant 0 : index
      %29 = vector.load %arg7[%c0_24, %c0_25] : memref<1x32xf32, #tpu.memory_space<vmem>>, vector<1x32xf32>
      tpu.vector_store %arg7[%c0_24, %c0_25], %28 {strides = array<i32>} : memref<1x32xf32, #tpu.memory_space<vmem>>, vector<1x32xf32>,
    } else {
    }
    %c0_8 = arith.constant 0 : index
    %c0_9 = arith.constant 0 : index
    %12 = vector.load %arg2[%c0_8, %c0_9] : memref<16x1xf32, #tpu.memory_space<vmem>>, vector<16x1xf32>
    %13 = vector.broadcast %12 : vector<16x1xf32> to vector<16x32xf32>
    %14 = arith.mulf %7, %13 : vector<16x32xf32>
    %c0_10 = arith.constant 0 : index
    %c0_11 = arith.constant 0 : index
    %15 = vector.load %arg6[%c0_10, %c0_11] : memref<1x32xf32, #tpu.memory_space<vmem>>, vector<1x32xf32>
    %cst_12 = arith.constant dense<0.000000e+00> : vector<32xf32>
    %16 = vector.multi_reduction <add>, %14, %cst_12 [0] : vector<16x32xf32> to vector<32xf32>
    %17 = vector.shape_cast %16 : vector<32xf32> to vector<1x32xf32>
    %18 = arith.addf %15, %17 : vector<1x32xf32>
    %c0_13 = arith.constant 0 : index
    %c0_14 = arith.constant 0 : index
    %19 = vector.load %arg6[%c0_13, %c0_14] : memref<1x32xf32, #tpu.memory_space<vmem>>, vector<1x32xf32>
    tpu.vector_store %arg6[%c0_13, %c0_14], %18 {strides = array<i32>} : memref<1x32xf32, #tpu.memory_space<vmem>>, vector<1x32xf32>,
    %c0_15 = arith.constant 0 : index
    %c0_16 = arith.constant 0 : index
    %20 = vector.load %arg7[%c0_15, %c0_16] : memref<1x32xf32, #tpu.memory_space<vmem>>, vector<1x32xf32>
    %21 = arith.mulf %14, %14 : vector<16x32xf32>
    %cst_17 = arith.constant dense<0.000000e+00> : vector<32xf32>
    %22 = vector.multi_reduction <add>, %21, %cst_17 [0] : vector<16x32xf32> to vector<32xf32>
    %23 = vector.shape_cast %22 : vector<32xf32> to vector<1x32xf32>
    %24 = arith.addf %20, %23 : vector<1x32xf32>
    %c0_18 = arith.constant 0 : index
    %c0_19 = arith.constant 0 : index
    %25 = vector.load %arg7[%c0_18, %c0_19] : memref<1x32xf32, #tpu.memory_space<vmem>>, vector<1x32xf32>
    tpu.vector_store %arg7[%c0_18, %c0_19], %24 {strides = array<i32>} : memref<1x32xf32, #tpu.memory_space<vmem>>, vector<1x32xf32>,
    return
  }
  func.func @transform_0(%arg0: i32) -> (i32, i32) {
    %c0_i32 = arith.constant 0 : i32
    %c0_i32_0 = arith.constant 0 : i32
    return %arg0, %c0_i32 : i32, i32
  }
  func.func @transform_1(%arg0: i32) -> (i32, i32) {
    %c0_i32 = arith.constant 0 : i32
    %c0_i32_0 = arith.constant 0 : i32
    return %arg0, %c0_i32 : i32, i32
  }
  func.func @transform_2(%arg0: i32) -> (i32, i32) {
    %c0_i32 = arith.constant 0 : i32
    %c0_i32_0 = arith.constant 0 : i32
    %c0_i32_1 = arith.constant 0 : i32
    return %c0_i32, %c0_i32_0 : i32, i32
  }
  func.func @transform_3(%arg0: i32) -> (i32, i32) {
    %c0_i32 = arith.constant 0 : i32
    %c0_i32_0 = arith.constant 0 : i32
    %c0_i32_1 = arith.constant 0 : i32
    return %c0_i32, %c0_i32_0 : i32, i32
  }
  func.func @transform_4(%arg0: i32) -> (i32, i32) {
    %c0_i32 = arith.constant 0 : i32
    %c0_i32_0 = arith.constant 0 : i32
    return %arg0, %c0_i32 : i32, i32
  }
  func.func @transform_5(%arg0: i32) -> (i32, i32) {
    %c0_i32 = arith.constant 0 : i32
    %c0_i32_0 = arith.constant 0 : i32
    %c0_i32_1 = arith.constant 0 : i32
    return %c0_i32, %c0_i32_0 : i32, i32
  }
  func.func @transform_6(%arg0: i32) -> (i32, i32) {
    %c0_i32 = arith.constant 0 : i32
    %c0_i32_0 = arith.constant 0 : i32
    %c0_i32_1 = arith.constant 0 : i32
    return %c0_i32, %c0_i32_0 : i32, i32
  }
}

</mosaic_0001>

<llo_original>
// kernel: tpu_custom_call.1
$region0: #{tpu_custom_call.1}
  #allocation0 [shape = 'u32[]', space=smem, size = 0x4, offset = 0x4, fixed_abs, tag = 'smem constant byte address 0x4 - core index']
  #allocation1 [shape = 'u32[144,128]{1,0:T(1,128)}', space=vmem, size = 0x12000, scoped, tag = 'internal scratch']
  %s0 = inlined_call_operand.vmem [shape: f32[16,4], index: 0, kind: input, shape index: {}]
  %s1 = inlined_call_operand.vmem [shape: f32[16,1], index: 1, kind: input, shape index: {}]
  %s2 = inlined_call_operand.vmem [shape: f32[4,32], index: 2, kind: input, shape index: {}]
  %s3 = inlined_call_operand.vmem [shape: f32[1,32], index: 3, kind: input, shape index: {}]
  %s4 = inlined_call_operand.hbm [shape: f32[16,32], index: 4, kind: output, shape index: {0}]
  %s5 = inlined_call_operand.hbm [shape: f32[1,32], index: 5, kind: output, shape index: {1}]
  %s6 = inlined_call_operand.hbm [shape: f32[1,32], index: 6, kind: output, shape index: {2}]
  %7 = xla_tuple %s4, %s5, %s6
  %s8 = sld [smem:[#allocation0]]
  $region46: #{tpu_custom_call.1} parent=0
    _
  %s10 = ssub.s32 1, %s8
  %s11 = scalar_select 0, %s10, %s8
  $region1: #{tpu_custom_call.1} parent=0
    #allocation2 [shape = 'u8[8192]{0}', space=vmem, size = 0x2000, scoped, tag = 'output window, operand 0, single buffered']
    #allocation3 [shape = 's32[1]{0}', space=sflag, size = 0x4, scoped, tag = 'scoped memory for tpu_custom_call.1']
    #allocation4 [shape = 'u8[512]{0}', space=vmem, size = 0x400, scoped, tag = 'output window, operand 1, single buffered']
    #allocation5 [shape = 's32[1]{0}', space=sflag, size = 0x4, scoped, tag = 'scoped memory for tpu_custom_call.1']
    #allocation6 [shape = 'u8[512]{0}', space=vmem, size = 0x400, scoped, tag = 'output window, operand 2, single buffered']
    %12 = vsyncpa [#allocation3], 0
    %13 = vsyncpa [#allocation5], 0
    // Predicated region
    $region2: #{tpu_custom_call.1} parent=1 // pred_check
      _
    $region3: #{tpu_custom_call.1} parent=1 // pred_check_branch
      %15 = sbr.rel (0) target = $region5
    $region4: #{tpu_custom_call.1} parent=1 // pred_region
      _
    $region5: #{tpu_custom_call.1} parent=1 // pred_fallthru
      _
    // Predicated region
    $region6: #{tpu_custom_call.1} parent=1 // pred_check
      _
    $region7: #{tpu_custom_call.1} parent=1 // pred_check_branch
      %17 = sbr.rel (0) target = $region9
    $region8: #{tpu_custom_call.1} parent=1 // pred_region
      _
    $region9: #{tpu_custom_call.1} parent=1 // pred_fallthru
      _
    // Predicated region
    $region10: #{tpu_custom_call.1} parent=1 // pred_check
      _
    $region11: #{tpu_custom_call.1} parent=1 // pred_check_branch
      %19 = sbr.rel (0) target = $region13
    $region12: #{tpu_custom_call.1} parent=1 // pred_region
      _
    $region13: #{tpu_custom_call.1} parent=1 // pred_fallthru
      _
    // Predicated region
    $region14: #{tpu_custom_call.1} parent=1 // pred_check
      _
    $region15: #{tpu_custom_call.1} parent=1 // pred_check_branch
      %21 = sbr.rel (0) target = $region17
    $region16: #{tpu_custom_call.1} parent=1 // pred_region
      _
    $region17: #{tpu_custom_call.1} parent=1 // pred_fallthru
      _
    %v23 = vld [vmem:[%s0] sm:$0xff]
    %v24 = vld [vmem:[%s0 + $0x8] sm:$0xff]
    %v25 = vpack.c.bf16 %v24, %v23
    %v26 = vld [vmem:[%s2] sm:$0xf]
    %v27 = vpack.c.bf16 %v26, %v26
    %v28 = vld [vmem:[%s3] sm:$0x1]
    %v30 = vlaneseq
    %v31 = vshrl.u32 %v30, 7
    %v32 = vsub.s32 0, %v31
    %v33 = vrot.slane %v28, %v32
    %vm35 = vcmask 31744
    %v37 = vsel %vm35, %v25, 0
    %vm39 = vcmask 1041408
    %v41 = vsel %vm39, %v27, 0
    %43 = vmatprep.subr.bf16.mxu0 0
    %44 = vmatpush1.bf16.msra.mxu0 %v41
    %45 = vmatprep.subr.bf16.mxu0 0
    %46 = vmatpush1.bf16.msra.mxu0 0
    %47 = vmatprep.subr.bf16.mxu0 0
    %48 = vmatpush1.bf16.msra.mxu0 0
    %49 = vmatprep.subr.bf16.mxu0 0
    %50 = vmatpush1.bf16.msra.mxu0 0
    %51 = vmatprep.subr.bf16.mxu0 0
    %52 = vmatpush1.bf16.msra.mxu0 0
    %53 = vmatprep.subr.bf16.mxu0 0
    %54 = vmatpush1.bf16.msra.mxu0 0
    %55 = vmatprep.subr.bf16.mxu0 0
    %56 = vmatpush1.bf16.msra.mxu0 0
    %57 = vmatprep.subr.bf16.mxu0 0
    %58 = vmatpush1.bf16.msra.mxu0 0
    %59 = vmatprep.subr.bf16.mxu0 0
    %60 = vmatpush1.bf16.msra.mxu0 0
    %61 = vmatprep.subr.bf16.mxu0 0
    %62 = vmatpush1.bf16.msra.mxu0 0
    %63 = vmatprep.subr.bf16.mxu0 0
    %64 = vmatpush1.bf16.msra.mxu0 0
    %65 = vmatprep.subr.bf16.mxu0 0
    %66 = vmatpush1.bf16.msra.mxu0 0
    %67 = vmatprep.subr.bf16.mxu0 0
    %68 = vmatpush1.bf16.msra.mxu0 0
    %69 = vmatprep.subr.bf16.mxu0 0
    %70 = vmatpush1.bf16.msra.mxu0 0
    %71 = vmatprep.subr.bf16.mxu0 0
    %72 = vmatpush1.bf16.msra.mxu0 0
    %73 = vmatprep.subr.bf16.mxu0 0
    %74 = vmatpush1.bf16.msra.mxu0 0
    %75 = vmatprep.mubr.bf16.mxu0 0
    %76 = vmatmul.mubr.bf16.gmra.mrb[0].mxu0 %v37
    %v77 = vpop.f32.mrb[0].mxu0
    %v78 = vadd.f32 %v33, %v77
    %v79 = vpop.f32.mrb[0].mxu0
    %v80 = vpop.f32.mrb[0].mxu0
    %v81 = vadd.f32 %v33, %v80
    %v82 = vpop.f32.mrb[0].mxu0
    %83 = vdwg.mxu0
    %vm84 = vcmask 261120
    %85 = vst.msk [vmem:[#allocation2] sm:$0xff] %vm84, %v78
    %86 = vst.msk [vmem:[#allocation2 + $0x8] sm:$0xff] %vm84, %v81
    %p87 = scmp.eq.s32.totalorder 0, 0
    // Predicated region
    $region18: #{tpu_custom_call.1} parent=1 // pred_check
      %p88 = pneg %p87
    $region19: #{tpu_custom_call.1} parent=1 // pred_check_branch
      %90 = sbr.rel (%p88) target = $region21
    $region20: #{tpu_custom_call.1} parent=1 // pred_region
      %vm91 = vcmask 253952
      %92 = vst.msk [vmem:[#allocation4] sm:$0x1] %vm91, 0.0
      %93 = vst.msk [vmem:[#allocation6] sm:$0x1] %vm91, 0.0
    $region21: #{tpu_custom_call.1} parent=1 // pred_fallthru
      _
    %v94 = vld [vmem:[%s1] sm:$0xff]
    %v95 = vld [vmem:[%s1 + $0x8] sm:$0xff]
    %97 = vset.pattern.permute.xlu0 0
    %98 = vperm.xlu0 %97, %v94
    %v99 = vpop.permute.xlu0 %98
    %102 = vset.pattern.permute.xlu0 0
    %103 = vperm.xlu0 %102, %v95
    %v104 = vpop.permute.xlu0 %103
    %v106 = vmul.f32 %v78, %v99
    %v107 = vmul.f32 %v81, %v104
    %v108 = vld [vmem:[#allocation4] sm:$0x1]
    %v109 = vsel %vm84, %v106, 0.0
    %v110 = vsel %vm84, %v107, 0.0
    %v111 = vadd.f32 %v109, %v110
    %v112 = vrot.slane %v111, 4
    %v113 = vadd.f32 %v111, %v112
    %v114 = vrot.slane %v113, 2
    %v115 = vadd.f32 %v113, %v114
    %v116 = vrot.slane %v115, 1
    %v117 = vadd.f32 %v115, %v116
    %v118 = vadd.f32 %v108, %v117
    %vm119 = vcmask 253952
    %120 = vst.msk [vmem:[#allocation4] sm:$0x1] %vm119, %v118
    %v121 = vld [vmem:[#allocation6] sm:$0x1]
    %v122 = vmul.f32 %v106, %v106
    %v123 = vmul.f32 %v107, %v107
    %v124 = vsel %vm84, %v122, 0.0
    %v125 = vsel %vm84, %v123, 0.0
    %v126 = vadd.f32 %v124, %v125
    %v127 = vrot.slane %v126, 4
    %v128 = vadd.f32 %v126, %v127
    %v129 = vrot.slane %v128, 2
    %v130 = vadd.f32 %v128, %v129
    %v131 = vrot.slane %v130, 1
    %v132 = vadd.f32 %v130, %v131
    %v133 = vadd.f32 %v121, %v132
    %134 = vst.msk [vmem:[#allocation6] sm:$0x1] %vm119, %v133
    // Predicated region
    $region22: #{tpu_custom_call.1} parent=1 // pred_check
      _
    $region23: #{tpu_custom_call.1} parent=1 // pred_check_branch
      %136 = sbr.rel (0) target = $region25
    $region24: #{tpu_custom_call.1} parent=1 // pred_region
      %s138 = ssub.s32 256, 256
      %139 = vsyncadd [#allocation3], %s138
      %s140 = sshll.u32 [#allocation2], 4
      %s141 = int_to_ptr.vmem [resolvable:$true] %s140
      %146 = dma.vmem_to_hbm [thread:$0]  %s141, 256, %s4, [#allocation3], 128, 128, 8
    $region25: #{tpu_custom_call.1} parent=1 // pred_fallthru
      _
    // Predicated region
    $region26: #{tpu_custom_call.1} parent=1 // pred_check
      _
    $region27: #{tpu_custom_call.1} parent=1 // pred_check_branch
      %148 = sbr.rel (0) target = $region29
    $region28: #{tpu_custom_call.1} parent=1 // pred_region
      %s150 = ssub.s32 16, 16
      %151 = vsyncadd [#allocation5], %s150
      %s153 = sshll.u32 [#allocation4], 4
      %s154 = int_to_ptr.vmem [resolvable:$true] %s153
      %156 = dma.vmem_to_hbm [thread:$0]  %s154, 16, %s5, [#allocation5]
    $region29: #{tpu_custom_call.1} parent=1 // pred_fallthru
      _
    // Predicated region
    $region30: #{tpu_custom_call.1} parent=1 // pred_check
      _
    $region31: #{tpu_custom_call.1} parent=1 // pred_check_branch
      %158 = sbr.rel (0) target = $region33
    $region32: #{tpu_custom_call.1} parent=1 // pred_region
      %s160 = ssub.s32 16, 16
      %161 = vsyncadd [#allocation5], %s160
      %s163 = sshll.u32 [#allocation6], 4
      %s164 = int_to_ptr.vmem [resolvable:$true] %s163
      %166 = dma.vmem_to_hbm [thread:$0]  %s164, 16, %s6, [#allocation5]
    $region33: #{tpu_custom_call.1} parent=1 // pred_fallthru
      _
    // Predicated region
    $region34: #{tpu_custom_call.1} parent=1 // pred_check
      _
    $region35: #{tpu_custom_call.1} parent=1 // pred_check_branch
      %168 = sbr.rel (0) target = $region37
    $region36: #{tpu_custom_call.1} parent=1 // pred_region
      %169 = dma.done [#allocation3], 256
    $region37: #{tpu_custom_call.1} parent=1 // pred_fallthru
      _
    // Predicated region
    $region38: #{tpu_custom_call.1} parent=1 // pred_check
      _
    $region39: #{tpu_custom_call.1} parent=1 // pred_check_branch
      %171 = sbr.rel (0) target = $region41
    $region40: #{tpu_custom_call.1} parent=1 // pred_region
      %172 = dma.done [#allocation5], 16
    $region41: #{tpu_custom_call.1} parent=1 // pred_fallthru
      _
    // Predicated region
    $region42: #{tpu_custom_call.1} parent=1 // pred_check
      _
    $region43: #{tpu_custom_call.1} parent=1 // pred_check_branch
      %174 = sbr.rel (0) target = $region45
    $region44: #{tpu_custom_call.1} parent=1 // pred_region
      %175 = dma.done [#allocation5], 16
    $region45: #{tpu_custom_call.1} parent=1 // pred_fallthru
      _
    %176 = vsyncpa [#allocation3], 1
    %177 = vsyncpa [#allocation5], 1

</llo_original>
